<compile_context>
chip_gen: v7x
topology: tpu7x:2x2x1
jax: 0.10.0
libtpu: 0.0.40
codegen_flags: <defaults>
</compile_context>

<pallas_src>
import jax
import jax.numpy as jnp
from jax.experimental import pallas as pl
from jax.experimental.pallas import tpu as pltpu


def _leaky_relu(x, slope=0.2):
    # slope < 1  =>  max(x, slope*x) == LeakyReLU(x); one vmax + one vmul.
    return jnp.maximum(x, slope * x)


def discriminator_kernel(x_ref, w1_ref, b1_ref, w2_ref, b2_ref,
                         w3_ref, b3_ref, o_ref):
    """One batch tile of the whole MLP.

    x_ref : (TB, D)   bf16 merged [data | condition] tile
    w1    : (D, 256)  bf16        b1 : (1, 256) f32
    w2    : (256,128) bf16        b2 : (1, 128) f32
    w3    : (1, 128)  f32 (row)   b3 : (1,) f32 in SMEM
    o_ref : (1, TB)   f32 lane-dense output row for this tile
    """
    x = x_ref[...]                                                   # bf16

    # Layer 1 (MXU, bf16 in / f32 accumulate) + bias + LeakyReLU (f32 VPU).
    h1 = jnp.dot(x, w1_ref[...], preferred_element_type=jnp.float32)
    h1 = _leaky_relu(h1 + b1_ref[...])

    # Layer 2 (MXU, bf16 in / f32 accumulate).
    h2 = jnp.dot(h1.astype(jnp.bfloat16), w2_ref[...],
                 preferred_element_type=jnp.float32) + b2_ref[...]
    h2 = _leaky_relu(h2)

    # Layer 3: (TB,128)@(128,1) as VPU multiply + cross-lane reduce (XLU),
    # keeping the MXU critical path to the first two matmuls only.
    logits = jnp.sum(h2 * w3_ref[...], axis=1) + b3_ref[0]          # (TB,)
    out = jax.nn.sigmoid(logits)
    o_ref[...] = out[None, :].astype(o_ref.dtype)                   # (1, TB)


def discriminator_forward(data, condition, params, *, tile_b=4096):
    """data: (B, input_dim), condition: (B, condition_dim) -> (B, 1) float32."""
    w1, b1, w2, b2, w3, b3 = params
    B = data.shape[0]
    D = data.shape[1] + condition.shape[1]

    # Merge once in the wrapper on bf16 values: one lane-padded input stream
    # instead of two, half the HBM bytes of f32 inputs.
    x = jnp.concatenate([data, condition], axis=1).astype(jnp.bfloat16)

    # Trace-time weight prep: bf16 MXU weights, f32 biases as rows,
    # W3 as a (1, 128) row for the VPU/XLU reduce, b3 scalar in SMEM.
    w1b = w1.astype(jnp.bfloat16)
    w2b = w2.astype(jnp.bfloat16)
    b1r = b1.reshape(1, -1).astype(jnp.float32)
    b2r = b2.reshape(1, -1).astype(jnp.float32)
    w3r = w3.reshape(1, -1).astype(jnp.float32)
    b3r = b3.reshape(-1).astype(jnp.float32)

    # Batch tiling: always 128-aligned so the (1, TB) output block is an
    # unmasked lane-dense store.  Tiny B -> a single small tile; otherwise
    # force >= 2 grid steps (v7x megacore) and cap the tile at tile_b.
    assert tile_b % 128 == 0, "tile_b must be a multiple of 128"
    round128 = lambda n: ((n + 127) // 128) * 128
    if B <= 512:
        tb = round128(B)
    else:
        tb = min(tile_b, round128(pl.cdiv(B, 2)))
    Bp = pl.cdiv(B, tb) * tb
    if Bp != B:
        x = jnp.pad(x, ((0, Bp - B), (0, 0)))
    n_tiles = Bp // tb

    # Weights/biases: full-block specs with constant index_map -> VMEM-resident
    # across all grid iterations (no per-step re-DMA).
    resident = lambda shape: pl.BlockSpec(shape, lambda i: (0, 0))

    out_row = pl.pallas_call(
        discriminator_kernel,
        out_shape=jax.ShapeDtypeStruct((1, Bp), jnp.float32),
        grid=(n_tiles,),
        in_specs=[
            pl.BlockSpec((tb, D), lambda i: (i, 0)),                 # x tile
            resident(w1b.shape), resident(b1r.shape),
            resident(w2b.shape), resident(b2r.shape),
            resident(w3r.shape),
            pl.BlockSpec(memory_space=pltpu.MemorySpace.SMEM),       # b3 scalar
        ],
        out_specs=pl.BlockSpec((1, tb), lambda i: (0, i)),
        compiler_params=pltpu.CompilerParams(
            dimension_semantics=("parallel",),      # megacore sharding on v7x
            # > v5e's 16 MiB default scoped VMEM (needed at large tiles),
            # ~25% headroom below v7x's 64 MiB physical VMEM per TC.
            vmem_limit_bytes=48 * 1024 * 1024,
        ),
    )(x, w1b, b1r, w2b, b2r, w3r, b3r)

    return out_row.reshape(Bp, 1)[:B]


def init_params(key, input_dim, condition_dim):
    """Mimics nn.Linear's uniform(-1/sqrt(fan_in), +1/sqrt(fan_in)) init."""
    D = input_dim + condition_dim
    dims = [(D, 256), (256, 128), (128, 1)]
    params = []
    for fan_in, fan_out in dims:
        key, kw, kb = jax.random.split(key, 3)
        bound = 1.0 / jnp.sqrt(fan_in)
        w = jax.random.uniform(kw, (fan_in, fan_out), jnp.float32, -bound, bound)
        b = jax.random.uniform(kb, (fan_out,), jnp.float32, -bound, bound)
        params += [w, b]
    return tuple(params)


def reference_forward(data, condition, params):
    """Pure-JAX f32 reference matching the PyTorch module."""
    w1, b1, w2, b2, w3, b3 = params
    x = jnp.concatenate([data, condition], axis=1)
    h1 = jnp.where(x @ w1 + b1 > 0, x @ w1 + b1, 0.2 * (x @ w1 + b1))
    h2 = jnp.where(h1 @ w2 + b2 > 0, h1 @ w2 + b2, 0.2 * (h1 @ w2 + b2))
    return jax.nn.sigmoid(h2 @ w3 + b3)


if __name__ == "__main__":
    key = jax.random.PRNGKey(0)
    B, input_dim, condition_dim = 8, 32, 16

    k_data, k_cond, k_params = jax.random.split(key, 3)
    data = jax.random.normal(k_data, (B, input_dim), jnp.float32)
    condition = jax.random.normal(k_cond, (B, condition_dim), jnp.float32)
    params = init_params(k_params, input_dim, condition_dim)

    fwd = jax.jit(discriminator_forward)
    out = jax.block_until_ready(fwd(data, condition, params))

    ref = reference_forward(data, condition, params)
    assert out.shape == (B, 1), out.shape
    # bf16 inputs/weights on the MXU with f32 accumulation -> relaxed tolerance.
    assert jnp.allclose(out, ref, atol=1e-2, rtol=1e-2), (
        float(jnp.max(jnp.abs(out - ref))))

    print("KERNEL_OK")
</pallas_src>

<mosaic_0001>
module attributes {stable_mosaic.version = 11 : i64} {
  func.func @discriminator_kernel(%arg0: i32, %arg1: memref<128x48xbf16, #tpu.memory_space<vmem>>, %arg2: memref<48x256xbf16, #tpu.memory_space<vmem>>, %arg3: memref<1x256xf32, #tpu.memory_space<vmem>>, %arg4: memref<256x128xbf16, #tpu.memory_space<vmem>>, %arg5: memref<1x128xf32, #tpu.memory_space<vmem>>, %arg6: memref<1x128xf32, #tpu.memory_space<vmem>>, %arg7: memref<1xf32, #tpu.memory_space<smem>>, %arg8: memref<1x128xf32, #tpu.memory_space<vmem>>) attributes {dimension_semantics = [#tpu.dimension_semantics<parallel>], iteration_bounds = array<i64: 1>, scalar_prefetch = 0 : i64, scratch_operands = 0 : i64, tpu.core_type = #tpu.core_type<tc>, window_params = [{transform_indices = @transform_0, window_bounds = array<i64: 128, 48>}, {pipeline_mode = #tpu.pipeline_mode<synchronous>, transform_indices = @transform_1, window_bounds = array<i64: 48, 256>}, {pipeline_mode = #tpu.pipeline_mode<synchronous>, transform_indices = @transform_2, window_bounds = array<i64: 1, 256>}, {pipeline_mode = #tpu.pipeline_mode<synchronous>, transform_indices = @transform_3, window_bounds = array<i64: 256, 128>}, {pipeline_mode = #tpu.pipeline_mode<synchronous>, transform_indices = @transform_4, window_bounds = array<i64: 1, 128>}, {pipeline_mode = #tpu.pipeline_mode<synchronous>, transform_indices = @transform_5, window_bounds = array<i64: 1, 128>}, {transform_indices = @transform_6, window_bounds = array<i64: 1>}, {transform_indices = @transform_7, window_bounds = array<i64: 1, 128>}]} {
    %c0 = arith.constant 0 : index
    %c0_0 = arith.constant 0 : index
    %0 = vector.load %arg1[%c0, %c0_0] : memref<128x48xbf16, #tpu.memory_space<vmem>>, vector<128x48xbf16>
    %c0_1 = arith.constant 0 : index
    %c0_2 = arith.constant 0 : index
    %1 = vector.load %arg2[%c0_1, %c0_2] : memref<48x256xbf16, #tpu.memory_space<vmem>>, vector<48x256xbf16>
    %cst = arith.constant dense<0.000000e+00> : vector<128x256xf32>
    %2 = tpu.matmul %0, %1, %cst {dimension_numbers = #tpu.dot_dimension_numbers<[1], [0], [0], [1], [0, 0, 1, 1], [], []>} : vector<128x48xbf16>, vector<48x256xbf16>, vector<128x256xf32> -> vector<128x256xf32>
    %c0_3 = arith.constant 0 : index
    %c0_4 = arith.constant 0 : index
    %3 = vector.load %arg3[%c0_3, %c0_4] : memref<1x256xf32, #tpu.memory_space<vmem>>, vector<1x256xf32>
    %4 = vector.broadcast %3 : vector<1x256xf32> to vector<128x256xf32>
    %5 = arith.addf %2, %4 : vector<128x256xf32>
    %cst_5 = arith.constant 2.000000e-01 : f32
    %6 = vector.broadcast %cst_5 : f32 to vector<128x256xf32>
    %7 = arith.mulf %6, %5 : vector<128x256xf32>
    %8 = arith.maximumf %5, %7 : vector<128x256xf32>
    %9 = arith.truncf %8 : vector<128x256xf32> to vector<128x256xbf16>
    %c0_6 = arith.constant 0 : index
    %c0_7 = arith.constant 0 : index
    %10 = vector.load %arg4[%c0_6, %c0_7] : memref<256x128xbf16, #tpu.memory_space<vmem>>, vector<256x128xbf16>
    %cst_8 = arith.constant dense<0.000000e+00> : vector<128x128xf32>
    %11 = tpu.matmul %9, %10, %cst_8 {dimension_numbers = #tpu.dot_dimension_numbers<[1], [0], [0], [1], [0, 0, 1, 1], [], []>} : vector<128x256xbf16>, vector<256x128xbf16>, vector<128x128xf32> -> vector<128x128xf32>
    %c0_9 = arith.constant 0 : index
    %c0_10 = arith.constant 0 : index
    %12 = vector.load %arg5[%c0_9, %c0_10] : memref<1x128xf32, #tpu.memory_space<vmem>>, vector<1x128xf32>
    %13 = vector.broadcast %12 : vector<1x128xf32> to vector<128x128xf32>
    %14 = arith.addf %11, %13 : vector<128x128xf32>
    %cst_11 = arith.constant 2.000000e-01 : f32
    %15 = vector.broadcast %cst_11 : f32 to vector<128x128xf32>
    %16 = arith.mulf %15, %14 : vector<128x128xf32>
    %17 = arith.maximumf %14, %16 : vector<128x128xf32>
    %c0_12 = arith.constant 0 : index
    %c0_13 = arith.constant 0 : index
    %18 = vector.load %arg6[%c0_12, %c0_13] : memref<1x128xf32, #tpu.memory_space<vmem>>, vector<1x128xf32>
    %19 = vector.broadcast %18 : vector<1x128xf32> to vector<128x128xf32>
    %20 = arith.mulf %17, %19 : vector<128x128xf32>
    %cst_14 = arith.constant dense<0.000000e+00> : vector<128xf32>
    %21 = vector.multi_reduction <add>, %20, %cst_14 [1] : vector<128x128xf32> to vector<128xf32>
    %c0_15 = arith.constant 0 : index
    %22 = memref.load %arg7[%c0_15] : memref<1xf32, #tpu.memory_space<smem>>
    %23 = vector.broadcast %22 : f32 to vector<128xf32>
    %24 = arith.addf %21, %23 : vector<128xf32>
    %25 = arith.negf %24 : vector<128xf32>
    %26 = math.exp %25 : vector<128xf32>
    %cst_16 = arith.constant 1.000000e+00 : f32
    %27 = vector.broadcast %cst_16 : f32 to vector<128xf32>
    %28 = arith.addf %27, %26 : vector<128xf32>
    %29 = arith.divf %27, %28 : vector<128xf32>
    %30 = vector.shape_cast %29 : vector<128xf32> to vector<1x128xf32>
    %c0_17 = arith.constant 0 : index
    %c0_18 = arith.constant 0 : index
    %31 = vector.load %arg8[%c0_17, %c0_18] : memref<1x128xf32, #tpu.memory_space<vmem>>, vector<1x128xf32>
    tpu.vector_store %arg8[%c0_17, %c0_18], %30 {strides = array<i32>} : memref<1x128xf32, #tpu.memory_space<vmem>>, vector<1x128xf32>,
    return
  }
  func.func @transform_0(%arg0: i32) -> (i32, i32) {
    %c0_i32 = arith.constant 0 : i32
    %c0_i32_0 = arith.constant 0 : i32
    return %arg0, %c0_i32 : i32, i32
  }
  func.func @transform_1(%arg0: i32) -> (i32, i32) {
    %c0_i32 = arith.constant 0 : i32
    %c0_i32_0 = arith.constant 0 : i32
    %c0_i32_1 = arith.constant 0 : i32
    return %c0_i32, %c0_i32_0 : i32, i32
  }
  func.func @transform_2(%arg0: i32) -> (i32, i32) {
    %c0_i32 = arith.constant 0 : i32
    %c0_i32_0 = arith.constant 0 : i32
    %c0_i32_1 = arith.constant 0 : i32
    return %c0_i32, %c0_i32_0 : i32, i32
  }
  func.func @transform_3(%arg0: i32) -> (i32, i32) {
    %c0_i32 = arith.constant 0 : i32
    %c0_i32_0 = arith.constant 0 : i32
    %c0_i32_1 = arith.constant 0 : i32
    return %c0_i32, %c0_i32_0 : i32, i32
  }
  func.func @transform_4(%arg0: i32) -> (i32, i32) {
    %c0_i32 = arith.constant 0 : i32
    %c0_i32_0 = arith.constant 0 : i32
    %c0_i32_1 = arith.constant 0 : i32
    return %c0_i32, %c0_i32_0 : i32, i32
  }
  func.func @transform_5(%arg0: i32) -> (i32, i32) {
    %c0_i32 = arith.constant 0 : i32
    %c0_i32_0 = arith.constant 0 : i32
    %c0_i32_1 = arith.constant 0 : i32
    return %c0_i32, %c0_i32_0 : i32, i32
  }
  func.func @transform_6(%arg0: i32) -> i32 {
    %c0_i32 = arith.constant 0 : i32
    %c0_i32_0 = arith.constant 0 : i32
    return %c0_i32 : i32
  }
  func.func @transform_7(%arg0: i32) -> (i32, i32) {
    %c0_i32 = arith.constant 0 : i32
    %c0_i32_0 = arith.constant 0 : i32
    return %c0_i32, %arg0 : i32, i32
  }
}

</mosaic_0001>

<llo_original>
// kernel: discriminator_forward.1
$region0: #{discriminator_forward.1}
  #allocation0 [shape = 'u32[]', space=smem, size = 0x4, offset = 0x4, fixed_abs, tag = 'smem constant byte address 0x4 - core index']
  #allocation1 [shape = 'u32[144,128]{1,0:T(1,128)}', space=vmem, size = 0x12000, scoped, tag = 'internal scratch']
  #allocation2 [shape = 'f32[1]{0:T(128)S(6)}', space=smem, size = 0x200, scoped, tag = 'scoped memory for discriminator_forward.1']
  %s0 = inlined_call_operand.vmem [shape: bf16[128,48], index: 0, kind: input, shape index: {}]
  %s1 = inlined_call_operand.vmem [shape: bf16[48,256], index: 1, kind: input, shape index: {}]
  %s2 = inlined_call_operand.vmem [shape: f32[1,256], index: 2, kind: input, shape index: {}]
  %s3 = inlined_call_operand.vmem [shape: bf16[256,128], index: 3, kind: input, shape index: {}]
  %s4 = inlined_call_operand.vmem [shape: f32[1,128], index: 4, kind: input, shape index: {}]
  %s5 = inlined_call_operand.vmem [shape: f32[1,128], index: 5, kind: input, shape index: {}]
  %s6 = inlined_call_operand.<no memory space> [shape: f32[1], index: 6, kind: input, shape index: {}]
  %s7 = inlined_call_operand.vmem [shape: f32[1,128], index: 7, kind: output, shape index: {}]
  %s8 = sld [smem:[#allocation0]]
  $region38: #{discriminator_forward.1} parent=0
    _
  %s10 = ssub.s32 1, %s8
  %s11 = scalar_select 0, %s10, %s8
  %12 = sst [smem:[#allocation2]] %s6
  // Predicated region
  $region2: #{discriminator_forward.1} parent=0 // pred_check
    _
  $region3: #{discriminator_forward.1} parent=0 // pred_check_branch
    %14 = sbr.rel (0) target = $region5
  $region4: #{discriminator_forward.1} parent=0 // pred_region
    _
  $region5: #{discriminator_forward.1} parent=0 // pred_fallthru
    _
  // Predicated region
  $region6: #{discriminator_forward.1} parent=0 // pred_check
    _
  $region7: #{discriminator_forward.1} parent=0 // pred_check_branch
    %16 = sbr.rel (0) target = $region9
  $region8: #{discriminator_forward.1} parent=0 // pred_region
    _
  $region9: #{discriminator_forward.1} parent=0 // pred_fallthru
    _
  // Predicated region
  $region10: #{discriminator_forward.1} parent=0 // pred_check
    _
  $region11: #{discriminator_forward.1} parent=0 // pred_check_branch
    %18 = sbr.rel (0) target = $region13
  $region12: #{discriminator_forward.1} parent=0 // pred_region
    _
  $region13: #{discriminator_forward.1} parent=0 // pred_fallthru
    _
  // Predicated region
  $region14: #{discriminator_forward.1} parent=0 // pred_check
    _
  $region15: #{discriminator_forward.1} parent=0 // pred_check_branch
    %20 = sbr.rel (0) target = $region17
  $region16: #{discriminator_forward.1} parent=0 // pred_region
    _
  $region17: #{discriminator_forward.1} parent=0 // pred_fallthru
    _
  // Predicated region
  $region18: #{discriminator_forward.1} parent=0 // pred_check
    _
  $region19: #{discriminator_forward.1} parent=0 // pred_check_branch
    %22 = sbr.rel (0) target = $region21
  $region20: #{discriminator_forward.1} parent=0 // pred_region
    _
  $region21: #{discriminator_forward.1} parent=0 // pred_fallthru
    _
  // Predicated region
  $region22: #{discriminator_forward.1} parent=0 // pred_check
    _
  $region23: #{discriminator_forward.1} parent=0 // pred_check_branch
    %24 = sbr.rel (0) target = $region25
  $region24: #{discriminator_forward.1} parent=0 // pred_region
    _
  $region25: #{discriminator_forward.1} parent=0 // pred_fallthru
    _
  // Predicated region
  $region26: #{discriminator_forward.1} parent=0 // pred_check
    _
  $region27: #{discriminator_forward.1} parent=0 // pred_check_branch
    %26 = sbr.rel (0) target = $region29
  $region28: #{discriminator_forward.1} parent=0 // pred_region
    _
  $region29: #{discriminator_forward.1} parent=0 // pred_fallthru
    _
  %v28 = vld [vmem:[%s0] sm:$0xf]
  %v29 = vld [vmem:[%s0 + $0x4] sm:$0xf]
  %v30 = vld [vmem:[%s0 + $0x8] sm:$0xf]
  %v31 = vld [vmem:[%s0 + $0xc] sm:$0xf]
  %v32 = vld [vmem:[%s0 + $0x10] sm:$0xf]
  %v33 = vld [vmem:[%s0 + $0x14] sm:$0xf]
  %v34 = vld [vmem:[%s0 + $0x18] sm:$0xf]
  %v35 = vld [vmem:[%s0 + $0x1c] sm:$0xf]
  %v36 = vld [vmem:[%s0 + $0x20] sm:$0xf]
  %v37 = vld [vmem:[%s0 + $0x24] sm:$0xf]
  %v38 = vld [vmem:[%s0 + $0x28] sm:$0xf]
  %v39 = vld [vmem:[%s0 + $0x2c] sm:$0xf]
  %v40 = vld [vmem:[%s0 + $0x30] sm:$0xf]
  %v41 = vld [vmem:[%s0 + $0x34] sm:$0xf]
  %v42 = vld [vmem:[%s0 + $0x38] sm:$0xf]
  %v43 = vld [vmem:[%s0 + $0x3c] sm:$0xf]
  %v44 = vld [vmem:[%s1] sm:$0xff]
  %v45 = vld [vmem:[%s1 + $0x8] sm:$0xff]
  %v46 = vld [vmem:[%s1 + $0x10] sm:$0xff]
  %v47 = vld [vmem:[%s1 + $0x18] sm:$0xff]
  %v48 = vld [vmem:[%s1 + $0x20] sm:$0xff]
  %v49 = vld [vmem:[%s1 + $0x28] sm:$0xff]
  %v50 = vld [vmem:[%s2] sm:$0x3]
  %v52 = vlaneseq
  %v53 = vshrl.u32 %v52, 7
  %v54 = vsub.s32 0, %v53
  %v55 = vrot.slane %v50, %v54
  %v56 = vlaneseq
  %v57 = vshrl.u32 %v56, 7
  %v58 = vsub.s32 1, %v57
  %v59 = vrot.slane %v50, %v58
  %v78 = vunpack.c.l.b16 %v28
  %v79 = vunpack.c.l.b16 %v29
  %v80 = vunpack.c.l.b16 %v30
  %v81 = vunpack.c.l.b16 %v31
  %v82 = vunpack.c.l.b16 %v32
  %v83 = vunpack.c.l.b16 %v33
  %v84 = vunpack.c.l.b16 %v34
  %v85 = vunpack.c.l.b16 %v35
  %v86 = vunpack.c.l.b16 %v36
  %v87 = vunpack.c.l.b16 %v37
  %v88 = vunpack.c.l.b16 %v38
  %v89 = vunpack.c.l.b16 %v39
  %v90 = vunpack.c.l.b16 %v40
  %v91 = vunpack.c.l.b16 %v41
  %v92 = vunpack.c.l.b16 %v42
  %v93 = vunpack.c.l.b16 %v43
  %v94 = vpack.c.b16 %v79, %v78
  %v95 = vpack.c.b16 %v81, %v80
  %v96 = vpack.c.b16 %v83, %v82
  %v97 = vpack.c.b16 %v85, %v84
  %v98 = vpack.c.b16 %v87, %v86
  %v99 = vpack.c.b16 %v89, %v88
  %v100 = vpack.c.b16 %v91, %v90
  %v101 = vpack.c.b16 %v93, %v92
  %v108 = vunpack.c.l.b16 %v44
  %v109 = vunpack.c.h.b16 %v44
  %v110 = vunpack.c.l.b16 %v45
  %v111 = vunpack.c.h.b16 %v45
  %v112 = vunpack.c.l.b16 %v46
  %v113 = vunpack.c.h.b16 %v46
  %v114 = vunpack.c.l.b16 %v47
  %v115 = vunpack.c.h.b16 %v47
  %v116 = vunpack.c.l.b16 %v48
  %v117 = vunpack.c.h.b16 %v48
  %v118 = vunpack.c.l.b16 %v49
  %v119 = vunpack.c.h.b16 %v49
  %v120 = vpack.c.b16 %v110, %v108
  %v121 = vpack.c.b16 %v111, %v109
  %v122 = vpack.c.b16 %v114, %v112
  %v123 = vpack.c.b16 %v115, %v113
  %v124 = vpack.c.b16 %v118, %v116
  %v125 = vpack.c.b16 %v119, %v117
  %vm132 = vcmask 392192
  %v134 = vsel %vm132, %v94, 0
  %v137 = vsel %vm132, %v95, 0
  %v140 = vsel %vm132, %v96, 0
  %v143 = vsel %vm132, %v97, 0
  %v146 = vsel %vm132, %v98, 0
  %v149 = vsel %vm132, %v99, 0
  %v152 = vsel %vm132, %v100, 0
  %v155 = vsel %vm132, %v101, 0
  %157 = vmatprep.subr.bf16.mxu0 %v121
  %158 = vmatpush1.bf16.msra.mxu0 %v120
  %159 = vmatprep.subr.bf16.mxu0 %v123
  %160 = vmatpush1.bf16.msra.mxu0 %v122
  %161 = vmatprep.subr.bf16.mxu0 %v125
  %162 = vmatpush1.bf16.msra.mxu0 %v124
  %163 = vmatprep.subr.bf16.mxu0 0
  %164 = vmatpush1.bf16.msra.mxu0 0
  %165 = vmatprep.subr.bf16.mxu0 0
  %166 = vmatpush1.bf16.msra.mxu0 0
  %167 = vmatprep.subr.bf16.mxu0 0
  %168 = vmatpush1.bf16.msra.mxu0 0
  %169 = vmatprep.subr.bf16.mxu0 0
  %170 = vmatpush1.bf16.msra.mxu0 0
  %171 = vmatprep.subr.bf16.mxu0 0
  %172 = vmatpush1.bf16.msra.mxu0 0
  %173 = vmatprep.subr.bf16.mxu0 0
  %174 = vmatpush1.bf16.msra.mxu0 0
  %175 = vmatprep.subr.bf16.mxu0 0
  %176 = vmatpush1.bf16.msra.mxu0 0
  %177 = vmatprep.subr.bf16.mxu0 0
  %178 = vmatpush1.bf16.msra.mxu0 0
  %179 = vmatprep.subr.bf16.mxu0 0
  %180 = vmatpush1.bf16.msra.mxu0 0
  %181 = vmatprep.subr.bf16.mxu0 0
  %182 = vmatpush1.bf16.msra.mxu0 0
  %183 = vmatprep.subr.bf16.mxu0 0
  %184 = vmatpush1.bf16.msra.mxu0 0
  %185 = vmatprep.subr.bf16.mxu0 0
  %186 = vmatpush1.bf16.msra.mxu0 0
  %187 = vmatprep.subr.bf16.mxu0 0
  %188 = vmatpush1.bf16.msra.mxu0 0
  %189 = vmatprep.mubr.bf16.mxu0 0
  %190 = vmatmul.mubr.bf16.gmra.mrb[0].mxu0 %v134
  %v191 = vpop.f32.mrb[0].mxu0
  %v192 = vadd.f32 %v55, %v191
  %v193 = vpop.f32.mrb[0].mxu0
  %v194 = vadd.f32 %v59, %v193
  %v195 = vpop.f32.mrb[0].mxu0
  %v196 = vadd.f32 %v55, %v195
  %v197 = vpop.f32.mrb[0].mxu0
  %v198 = vadd.f32 %v59, %v197
  %199 = vmatprep.mubr.bf16.mxu0 0
  %200 = vmatmul.mubr.bf16.gmra.mrb[0].mxu0 %v137
  %v201 = vpop.f32.mrb[0].mxu0
  %v202 = vadd.f32 %v55, %v201
  %v203 = vpop.f32.mrb[0].mxu0
  %v204 = vadd.f32 %v59, %v203
  %v205 = vpop.f32.mrb[0].mxu0
  %v206 = vadd.f32 %v55, %v205
  %v207 = vpop.f32.mrb[0].mxu0
  %v208 = vadd.f32 %v59, %v207
  %209 = vmatprep.mubr.bf16.mxu0 0
  %210 = vmatmul.mubr.bf16.gmra.mrb[0].mxu0 %v140
  %v211 = vpop.f32.mrb[0].mxu0
  %v212 = vadd.f32 %v55, %v211
  %v213 = vpop.f32.mrb[0].mxu0
  %v214 = vadd.f32 %v59, %v213
  %v215 = vpop.f32.mrb[0].mxu0
  %v216 = vadd.f32 %v55, %v215
  %v217 = vpop.f32.mrb[0].mxu0
  %v218 = vadd.f32 %v59, %v217
  %219 = vmatprep.mubr.bf16.mxu0 0
  %220 = vmatmul.mubr.bf16.gmra.mrb[0].mxu0 %v143
  %v221 = vpop.f32.mrb[0].mxu0
  %v222 = vadd.f32 %v55, %v221
  %v223 = vpop.f32.mrb[0].mxu0
  %v224 = vadd.f32 %v59, %v223
  %v225 = vpop.f32.mrb[0].mxu0
  %v226 = vadd.f32 %v55, %v225
  %v227 = vpop.f32.mrb[0].mxu0
  %v228 = vadd.f32 %v59, %v227
  %229 = vmatprep.mubr.bf16.mxu0 0
  %230 = vmatmul.mubr.bf16.gmra.mrb[0].mxu0 %v146
  %v231 = vpop.f32.mrb[0].mxu0
  %v232 = vadd.f32 %v55, %v231
  %v233 = vpop.f32.mrb[0].mxu0
  %v234 = vadd.f32 %v59, %v233
  %v235 = vpop.f32.mrb[0].mxu0
  %v236 = vadd.f32 %v55, %v235
  %v237 = vpop.f32.mrb[0].mxu0
  %v238 = vadd.f32 %v59, %v237
  %239 = vmatprep.mubr.bf16.mxu0 0
  %240 = vmatmul.mubr.bf16.gmra.mrb[0].mxu0 %v149
  %v241 = vpop.f32.mrb[0].mxu0
  %v242 = vadd.f32 %v55, %v241
  %v243 = vpop.f32.mrb[0].mxu0
  %v244 = vadd.f32 %v59, %v243
  %v245 = vpop.f32.mrb[0].mxu0
  %v246 = vadd.f32 %v55, %v245
  %v247 = vpop.f32.mrb[0].mxu0
  %v248 = vadd.f32 %v59, %v247
  %249 = vmatprep.mubr.bf16.mxu0 0
  %250 = vmatmul.mubr.bf16.gmra.mrb[0].mxu0 %v152
  %v251 = vpop.f32.mrb[0].mxu0
  %v252 = vadd.f32 %v55, %v251
  %v253 = vpop.f32.mrb[0].mxu0
  %v254 = vadd.f32 %v59, %v253
  %v255 = vpop.f32.mrb[0].mxu0
  %v256 = vadd.f32 %v55, %v255
  %v257 = vpop.f32.mrb[0].mxu0
  %v258 = vadd.f32 %v59, %v257
  %259 = vmatprep.mubr.bf16.mxu0 0
  %260 = vmatmul.mubr.bf16.gmra.mrb[0].mxu0 %v155
  %v261 = vpop.f32.mrb[0].mxu0
  %v262 = vadd.f32 %v55, %v261
  %v263 = vpop.f32.mrb[0].mxu0
  %v264 = vadd.f32 %v59, %v263
  %v265 = vpop.f32.mrb[0].mxu0
  %v266 = vadd.f32 %v55, %v265
  %v267 = vpop.f32.mrb[0].mxu0
  %v268 = vadd.f32 %v59, %v267
  %269 = vdwg.mxu0
  %v270 = vmul.f32 %v192, 0.2
  %v271 = vmul.f32 %v194, 0.2
  %v272 = vmul.f32 %v196, 0.2
  %v273 = vmul.f32 %v198, 0.2
  %v274 = vmul.f32 %v202, 0.2
  %v275 = vmul.f32 %v204, 0.2
  %v276 = vmul.f32 %v206, 0.2
  %v277 = vmul.f32 %v208, 0.2
  %v278 = vmul.f32 %v212, 0.2
  %v279 = vmul.f32 %v214, 0.2
  %v280 = vmul.f32 %v216, 0.2
  %v281 = vmul.f32 %v218, 0.2
  %v282 = vmul.f32 %v222, 0.2
  %v283 = vmul.f32 %v224, 0.2
  %v284 = vmul.f32 %v226, 0.2
  %v285 = vmul.f32 %v228, 0.2
  %v286 = vmul.f32 %v232, 0.2
  %v287 = vmul.f32 %v234, 0.2
  %v288 = vmul.f32 %v236, 0.2
  %v289 = vmul.f32 %v238, 0.2
  %v290 = vmul.f32 %v242, 0.2
  %v291 = vmul.f32 %v244, 0.2
  %v292 = vmul.f32 %v246, 0.2
  %v293 = vmul.f32 %v248, 0.2
  %v294 = vmul.f32 %v252, 0.2
  %v295 = vmul.f32 %v254, 0.2
  %v296 = vmul.f32 %v256, 0.2
  %v297 = vmul.f32 %v258, 0.2
  %v298 = vmul.f32 %v262, 0.2
  %v299 = vmul.f32 %v264, 0.2
  %v300 = vmul.f32 %v266, 0.2
  %v301 = vmul.f32 %v268, 0.2
  %v302 = vmax.f32 %v192, %v270
  %v303 = vmax.f32 %v194, %v271
  %v304 = vmax.f32 %v196, %v272
  %v305 = vmax.f32 %v198, %v273
  %v306 = vmax.f32 %v202, %v274
  %v307 = vmax.f32 %v204, %v275
  %v308 = vmax.f32 %v206, %v276
  %v309 = vmax.f32 %v208, %v277
  %v310 = vmax.f32 %v212, %v278
  %v311 = vmax.f32 %v214, %v279
  %v312 = vmax.f32 %v216, %v280
  %v313 = vmax.f32 %v218, %v281
  %v314 = vmax.f32 %v222, %v282
  %v315 = vmax.f32 %v224, %v283
  %v316 = vmax.f32 %v226, %v284
  %v317 = vmax.f32 %v228, %v285
  %v318 = vmax.f32 %v232, %v286
  %v319 = vmax.f32 %v234, %v287
  %v320 = vmax.f32 %v236, %v288
  %v321 = vmax.f32 %v238, %v289
  %v322 = vmax.f32 %v242, %v290
  %v323 = vmax.f32 %v244, %v291
  %v324 = vmax.f32 %v246, %v292
  %v325 = vmax.f32 %v248, %v293
  %v326 = vmax.f32 %v252, %v294
  %v327 = vmax.f32 %v254, %v295
  %v328 = vmax.f32 %v256, %v296
  %v329 = vmax.f32 %v258, %v297
  %v330 = vmax.f32 %v262, %v298
  %v331 = vmax.f32 %v264, %v299
  %v332 = vmax.f32 %v266, %v300
  %v333 = vmax.f32 %v268, %v301
  %v334 = vpack.c.bf16 %v304, %v302
  %v335 = vpack.c.bf16 %v305, %v303
  %v336 = vpack.c.bf16 %v308, %v306
  %v337 = vpack.c.bf16 %v309, %v307
  %v338 = vpack.c.bf16 %v312, %v310
  %v339 = vpack.c.bf16 %v313, %v311
  %v340 = vpack.c.bf16 %v316, %v314
  %v341 = vpack.c.bf16 %v317, %v315
  %v342 = vpack.c.bf16 %v320, %v318
  %v343 = vpack.c.bf16 %v321, %v319
  %v344 = vpack.c.bf16 %v324, %v322
  %v345 = vpack.c.bf16 %v325, %v323
  %v346 = vpack.c.bf16 %v328, %v326
  %v347 = vpack.c.bf16 %v329, %v327
  %v348 = vpack.c.bf16 %v332, %v330
  %v349 = vpack.c.bf16 %v333, %v331
  %v350 = vld [vmem:[%s3] sm:$0xf]
  %v351 = vld [vmem:[%s3 + $0x4] sm:$0xf]
  %v352 = vld [vmem:[%s3 + $0x8] sm:$0xf]
  %v353 = vld [vmem:[%s3 + $0xc] sm:$0xf]
  %v354 = vld [vmem:[%s3 + $0x10] sm:$0xf]
  %v355 = vld [vmem:[%s3 + $0x14] sm:$0xf]
  %v356 = vld [vmem:[%s3 + $0x18] sm:$0xf]
  %v357 = vld [vmem:[%s3 + $0x1c] sm:$0xf]
  %v358 = vld [vmem:[%s3 + $0x20] sm:$0xf]
  %v359 = vld [vmem:[%s3 + $0x24] sm:$0xf]
  %v360 = vld [vmem:[%s3 + $0x28] sm:$0xf]
  %v361 = vld [vmem:[%s3 + $0x2c] sm:$0xf]
  %v362 = vld [vmem:[%s3 + $0x30] sm:$0xf]
  %v363 = vld [vmem:[%s3 + $0x34] sm:$0xf]
  %v364 = vld [vmem:[%s3 + $0x38] sm:$0xf]
  %v365 = vld [vmem:[%s3 + $0x3c] sm:$0xf]
  %v366 = vld [vmem:[%s3 + $0x40] sm:$0xf]
  %v367 = vld [vmem:[%s3 + $0x44] sm:$0xf]
  %v368 = vld [vmem:[%s3 + $0x48] sm:$0xf]
  %v369 = vld [vmem:[%s3 + $0x4c] sm:$0xf]
  %v370 = vld [vmem:[%s3 + $0x50] sm:$0xf]
  %v371 = vld [vmem:[%s3 + $0x54] sm:$0xf]
  %v372 = vld [vmem:[%s3 + $0x58] sm:$0xf]
  %v373 = vld [vmem:[%s3 + $0x5c] sm:$0xf]
  %v374 = vld [vmem:[%s3 + $0x60] sm:$0xf]
  %v375 = vld [vmem:[%s3 + $0x64] sm:$0xf]
  %v376 = vld [vmem:[%s3 + $0x68] sm:$0xf]
  %v377 = vld [vmem:[%s3 + $0x6c] sm:$0xf]
  %v378 = vld [vmem:[%s3 + $0x70] sm:$0xf]
  %v379 = vld [vmem:[%s3 + $0x74] sm:$0xf]
  %v380 = vld [vmem:[%s3 + $0x78] sm:$0xf]
  %v381 = vld [vmem:[%s3 + $0x7c] sm:$0xf]
  %v382 = vld [vmem:[%s4] sm:$0x1]
  %v384 = vlaneseq
  %v385 = vshrl.u32 %v384, 7
  %v386 = vsub.s32 0, %v385
  %v387 = vrot.slane %v382, %v386
  %v421 = vunpack.c.l.b16 %v350
  %v422 = vunpack.c.l.b16 %v351
  %v423 = vunpack.c.l.b16 %v352
  %v424 = vunpack.c.l.b16 %v353
  %v425 = vunpack.c.l.b16 %v354
  %v426 = vunpack.c.l.b16 %v355
  %v427 = vunpack.c.l.b16 %v356
  %v428 = vunpack.c.l.b16 %v357
  %v429 = vunpack.c.l.b16 %v358
  %v430 = vunpack.c.l.b16 %v359
  %v431 = vunpack.c.l.b16 %v360
  %v432 = vunpack.c.l.b16 %v361
  %v433 = vunpack.c.l.b16 %v362
  %v434 = vunpack.c.l.b16 %v363
  %v435 = vunpack.c.l.b16 %v364
  %v436 = vunpack.c.l.b16 %v365
  %v437 = vunpack.c.l.b16 %v366
  %v438 = vunpack.c.l.b16 %v367
  %v439 = vunpack.c.l.b16 %v368
  %v440 = vunpack.c.l.b16 %v369
  %v441 = vunpack.c.l.b16 %v370
  %v442 = vunpack.c.l.b16 %v371
  %v443 = vunpack.c.l.b16 %v372
  %v444 = vunpack.c.l.b16 %v373
  %v445 = vunpack.c.l.b16 %v374
  %v446 = vunpack.c.l.b16 %v375
  %v447 = vunpack.c.l.b16 %v376
  %v448 = vunpack.c.l.b16 %v377
  %v449 = vunpack.c.l.b16 %v378
  %v450 = vunpack.c.l.b16 %v379
  %v451 = vunpack.c.l.b16 %v380
  %v452 = vunpack.c.l.b16 %v381
  %v453 = vpack.c.b16 %v422, %v421
  %v454 = vpack.c.b16 %v424, %v423
  %v455 = vpack.c.b16 %v426, %v425
  %v456 = vpack.c.b16 %v428, %v427
  %v457 = vpack.c.b16 %v430, %v429
  %v458 = vpack.c.b16 %v432, %v431
  %v459 = vpack.c.b16 %v434, %v433
  %v460 = vpack.c.b16 %v436, %v435
  %v461 = vpack.c.b16 %v438, %v437
  %v462 = vpack.c.b16 %v440, %v439
  %v463 = vpack.c.b16 %v442, %v441
  %v464 = vpack.c.b16 %v444, %v443
  %v465 = vpack.c.b16 %v446, %v445
  %v466 = vpack.c.b16 %v448, %v447
  %v467 = vpack.c.b16 %v450, %v449
  %v468 = vpack.c.b16 %v452, %v451
  %485 = vmatprep.subr.bf16.mxu0 0
  %486 = vmatpush1.bf16.msra.mxu0 %v453
  %487 = vmatprep.subr.bf16.mxu0 0
  %488 = vmatpush1.bf16.msra.mxu0 %v454
  %489 = vmatprep.subr.bf16.mxu0 0
  %490 = vmatpush1.bf16.msra.mxu0 %v455
  %491 = vmatprep.subr.bf16.mxu0 0
  %492 = vmatpush1.bf16.msra.mxu0 %v456
  %493 = vmatprep.subr.bf16.mxu0 0
  %494 = vmatpush1.bf16.msra.mxu0 %v457
  %495 = vmatprep.subr.bf16.mxu0 0
  %496 = vmatpush1.bf16.msra.mxu0 %v458
  %497 = vmatprep.subr.bf16.mxu0 0
  %498 = vmatpush1.bf16.msra.mxu0 %v459
  %499 = vmatprep.subr.bf16.mxu0 0
  %500 = vmatpush1.bf16.msra.mxu0 %v460
  %501 = vmatprep.subr.bf16.mxu0 0
  %502 = vmatpush1.bf16.msra.mxu0 %v461
  %503 = vmatprep.subr.bf16.mxu0 0
  %504 = vmatpush1.bf16.msra.mxu0 %v462
  %505 = vmatprep.subr.bf16.mxu0 0
  %506 = vmatpush1.bf16.msra.mxu0 %v463
  %507 = vmatprep.subr.bf16.mxu0 0
  %508 = vmatpush1.bf16.msra.mxu0 %v464
  %509 = vmatprep.subr.bf16.mxu0 0
  %510 = vmatpush1.bf16.msra.mxu0 %v465
  %511 = vmatprep.subr.bf16.mxu0 0
  %512 = vmatpush1.bf16.msra.mxu0 %v466
  %513 = vmatprep.subr.bf16.mxu0 0
  %514 = vmatpush1.bf16.msra.mxu0 %v467
  %515 = vmatprep.subr.bf16.mxu0 0
  %516 = vmatpush1.bf16.msra.mxu0 %v468
  %517 = vmatprep.mubr.bf16.mxu0 %v335
  %518 = vmatmul.mubr.bf16.gmra.mrb[0].mxu0 %v334
  %v519 = vpop.f32.mrb[0].mxu0
  %v520 = vadd.f32 %v387, %v519
  %v521 = vpop.f32.mrb[0].mxu0
  %v522 = vpop.f32.mrb[0].mxu0
  %v523 = vadd.f32 %v387, %v522
  %v524 = vpop.f32.mrb[0].mxu0
  %525 = vmatprep.mubr.bf16.mxu0 %v337
  %526 = vmatmul.mubr.bf16.gmra.mrb[0].mxu0 %v336
  %v527 = vpop.f32.mrb[0].mxu0
  %v528 = vadd.f32 %v387, %v527
  %v529 = vpop.f32.mrb[0].mxu0
  %v530 = vpop.f32.mrb[0].mxu0
  %v531 = vadd.f32 %v387, %v530
  %v532 = vpop.f32.mrb[0].mxu0
  %533 = vmatprep.mubr.bf16.mxu0 %v339
  %534 = vmatmul.mubr.bf16.gmra.mrb[0].mxu0 %v338
  %v535 = vpop.f32.mrb[0].mxu0
  %v536 = vadd.f32 %v387, %v535
  %v537 = vpop.f32.mrb[0].mxu0
  %v538 = vpop.f32.mrb[0].mxu0
  %v539 = vadd.f32 %v387, %v538
  %v540 = vpop.f32.mrb[0].mxu0
  %541 = vmatprep.mubr.bf16.mxu0 %v341
  %542 = vmatmul.mubr.bf16.gmra.mrb[0].mxu0 %v340
  %v543 = vpop.f32.mrb[0].mxu0
  %v544 = vadd.f32 %v387, %v543
  %v545 = vpop.f32.mrb[0].mxu0
  %v546 = vpop.f32.mrb[0].mxu0
  %v547 = vadd.f32 %v387, %v546
  %v548 = vpop.f32.mrb[0].mxu0
  %549 = vmatprep.mubr.bf16.mxu0 %v343
  %550 = vmatmul.mubr.bf16.gmra.mrb[0].mxu0 %v342
  %v551 = vpop.f32.mrb[0].mxu0
  %v552 = vadd.f32 %v387, %v551
  %v553 = vpop.f32.mrb[0].mxu0
  %v554 = vpop.f32.mrb[0].mxu0
  %v555 = vadd.f32 %v387, %v554
  %v556 = vpop.f32.mrb[0].mxu0
  %557 = vmatprep.mubr.bf16.mxu0 %v345
  %558 = vmatmul.mubr.bf16.gmra.mrb[0].mxu0 %v344
  %v559 = vpop.f32.mrb[0].mxu0
  %v560 = vadd.f32 %v387, %v559
  %v561 = vpop.f32.mrb[0].mxu0
  %v562 = vpop.f32.mrb[0].mxu0
  %v563 = vadd.f32 %v387, %v562
  %v564 = vpop.f32.mrb[0].mxu0
  %565 = vmatprep.mubr.bf16.mxu0 %v347
  %566 = vmatmul.mubr.bf16.gmra.mrb[0].mxu0 %v346
  %v567 = vpop.f32.mrb[0].mxu0
  %v568 = vadd.f32 %v387, %v567
  %v569 = vpop.f32.mrb[0].mxu0
  %v570 = vpop.f32.mrb[0].mxu0
  %v571 = vadd.f32 %v387, %v570
  %v572 = vpop.f32.mrb[0].mxu0
  %573 = vmatprep.mubr.bf16.mxu0 %v349
  %574 = vmatmul.mubr.bf16.gmra.mrb[0].mxu0 %v348
  %v575 = vpop.f32.mrb[0].mxu0
  %v576 = vadd.f32 %v387, %v575
  %v577 = vpop.f32.mrb[0].mxu0
  %v578 = vpop.f32.mrb[0].mxu0
  %v579 = vadd.f32 %v387, %v578
  %v580 = vpop.f32.mrb[0].mxu0
  %581 = vdwg.mxu0
  %v582 = vmul.f32 %v520, 0.2
  %v583 = vmul.f32 %v523, 0.2
  %v584 = vmul.f32 %v528, 0.2
  %v585 = vmul.f32 %v531, 0.2
  %v586 = vmul.f32 %v536, 0.2
  %v587 = vmul.f32 %v539, 0.2
  %v588 = vmul.f32 %v544, 0.2
  %v589 = vmul.f32 %v547, 0.2
  %v590 = vmul.f32 %v552, 0.2
  %v591 = vmul.f32 %v555, 0.2
  %v592 = vmul.f32 %v560, 0.2
  %v593 = vmul.f32 %v563, 0.2
  %v594 = vmul.f32 %v568, 0.2
  %v595 = vmul.f32 %v571, 0.2
  %v596 = vmul.f32 %v576, 0.2
  %v597 = vmul.f32 %v579, 0.2
  %v598 = vmax.f32 %v520, %v582
  %v599 = vmax.f32 %v523, %v583
  %v600 = vmax.f32 %v528, %v584
  %v601 = vmax.f32 %v531, %v585
  %v602 = vmax.f32 %v536, %v586
  %v603 = vmax.f32 %v539, %v587
  %v604 = vmax.f32 %v544, %v588
  %v605 = vmax.f32 %v547, %v589
  %v606 = vmax.f32 %v552, %v590
  %v607 = vmax.f32 %v555, %v591
  %v608 = vmax.f32 %v560, %v592
  %v609 = vmax.f32 %v563, %v593
  %v610 = vmax.f32 %v568, %v594
  %v611 = vmax.f32 %v571, %v595
  %v612 = vmax.f32 %v576, %v596
  %v613 = vmax.f32 %v579, %v597
  %v614 = vld [vmem:[%s5] sm:$0x1]
  %v616 = vlaneseq
  %v617 = vshrl.u32 %v616, 7
  %v618 = vsub.s32 0, %v617
  %v619 = vrot.slane %v614, %v618
  %v621 = vmul.f32 %v598, %v619
  %v622 = vmul.f32 %v599, %v619
  %v623 = vmul.f32 %v600, %v619
  %v624 = vmul.f32 %v601, %v619
  %v625 = vmul.f32 %v602, %v619
  %v626 = vmul.f32 %v603, %v619
  %v627 = vmul.f32 %v604, %v619
  %v628 = vmul.f32 %v605, %v619
  %v629 = vmul.f32 %v606, %v619
  %v630 = vmul.f32 %v607, %v619
  %v631 = vmul.f32 %v608, %v619
  %v632 = vmul.f32 %v609, %v619
  %v633 = vmul.f32 %v610, %v619
  %v634 = vmul.f32 %v611, %v619
  %v635 = vmul.f32 %v612, %v619
  %v636 = vmul.f32 %v613, %v619
  %637 = vadd.xlane.f32.xlu0 %v621
  %v638 = vpop.xlane.xlu0 %637
  %639 = vadd.xlane.f32.xlu0 %v622
  %v640 = vpop.xlane.xlu0 %639
  %641 = vadd.xlane.f32.xlu0 %v623
  %v642 = vpop.xlane.xlu0 %641
  %643 = vadd.xlane.f32.xlu0 %v624
  %v644 = vpop.xlane.xlu0 %643
  %645 = vadd.xlane.f32.xlu0 %v625
  %v646 = vpop.xlane.xlu0 %645
  %647 = vadd.xlane.f32.xlu0 %v626
  %v648 = vpop.xlane.xlu0 %647
  %649 = vadd.xlane.f32.xlu0 %v627
  %v650 = vpop.xlane.xlu0 %649
  %651 = vadd.xlane.f32.xlu0 %v628
  %v652 = vpop.xlane.xlu0 %651
  %653 = vadd.xlane.f32.xlu0 %v629
  %v654 = vpop.xlane.xlu0 %653
  %655 = vadd.xlane.f32.xlu0 %v630
  %v656 = vpop.xlane.xlu0 %655
  %657 = vadd.xlane.f32.xlu0 %v631
  %v658 = vpop.xlane.xlu0 %657
  %659 = vadd.xlane.f32.xlu0 %v632
  %v660 = vpop.xlane.xlu0 %659
  %661 = vadd.xlane.f32.xlu0 %v633
  %v662 = vpop.xlane.xlu0 %661
  %663 = vadd.xlane.f32.xlu0 %v634
  %v664 = vpop.xlane.xlu0 %663
  %665 = vadd.xlane.f32.xlu0 %v635
  %v666 = vpop.xlane.xlu0 %665
  %667 = vadd.xlane.f32.xlu0 %v636
  %v668 = vpop.xlane.xlu0 %667
  %s669 = sld [smem:[#allocation2]]
  %v670 = vstv %s669
  %v671 = vadd.f32 %v638, %v670
  %v672 = vadd.f32 %v640, %v670
  %v673 = vadd.f32 %v642, %v670
  %v674 = vadd.f32 %v644, %v670
  %v675 = vadd.f32 %v646, %v670
  %v676 = vadd.f32 %v648, %v670
  %v677 = vadd.f32 %v650, %v670
  %v678 = vadd.f32 %v652, %v670
  %v679 = vadd.f32 %v654, %v670
  %v680 = vadd.f32 %v656, %v670
  %v681 = vadd.f32 %v658, %v670
  %v682 = vadd.f32 %v660, %v670
  %v683 = vadd.f32 %v662, %v670
  %v684 = vadd.f32 %v664, %v670
  %v685 = vadd.f32 %v666, %v670
  %v686 = vadd.f32 %v668, %v670
  %v687 = vxor.u32 %v671, 2147483648
  %v688 = vxor.u32 %v672, 2147483648
  %v689 = vxor.u32 %v673, 2147483648
  %v690 = vxor.u32 %v674, 2147483648
  %v691 = vxor.u32 %v675, 2147483648
  %v692 = vxor.u32 %v676, 2147483648
  %v693 = vxor.u32 %v677, 2147483648
  %v694 = vxor.u32 %v678, 2147483648
  %v695 = vxor.u32 %v679, 2147483648
  %v696 = vxor.u32 %v680, 2147483648
  %v697 = vxor.u32 %v681, 2147483648
  %v698 = vxor.u32 %v682, 2147483648
  %v699 = vxor.u32 %v683, 2147483648
  %v700 = vxor.u32 %v684, 2147483648
  %v701 = vxor.u32 %v685, 2147483648
  %v702 = vxor.u32 %v686, 2147483648
  %v703 = vmul.f32 %v687, 1.442695
  %v704 = vpow.pop %v703
  %v705 = vmul.f32 %v688, 1.442695
  %v706 = vpow.pop %v705
  %v707 = vmul.f32 %v689, 1.442695
  %v708 = vpow.pop %v707
  %v709 = vmul.f32 %v690, 1.442695
  %v710 = vpow.pop %v709
  %v711 = vmul.f32 %v691, 1.442695
  %v712 = vpow.pop %v711
  %v713 = vmul.f32 %v692, 1.442695
  %v714 = vpow.pop %v713
  %v715 = vmul.f32 %v693, 1.442695
  %v716 = vpow.pop %v715
  %v717 = vmul.f32 %v694, 1.442695
  %v718 = vpow.pop %v717
  %v719 = vmul.f32 %v695, 1.442695
  %v720 = vpow.pop %v719
  %v721 = vmul.f32 %v696, 1.442695
  %v722 = vpow.pop %v721
  %v723 = vmul.f32 %v697, 1.442695
  %v724 = vpow.pop %v723
  %v725 = vmul.f32 %v698, 1.442695
  %v726 = vpow.pop %v725
  %v727 = vmul.f32 %v699, 1.442695
  %v728 = vpow.pop %v727
  %v729 = vmul.f32 %v700, 1.442695
  %v730 = vpow.pop %v729
  %v731 = vmul.f32 %v701, 1.442695
  %v732 = vpow.pop %v731
  %v733 = vmul.f32 %v702, 1.442695
  %v734 = vpow.pop %v733
  %v735 = vadd.f32 %v704, 1.0
  %v736 = vadd.f32 %v706, 1.0
  %v737 = vadd.f32 %v708, 1.0
  %v738 = vadd.f32 %v710, 1.0
  %v739 = vadd.f32 %v712, 1.0
  %v740 = vadd.f32 %v714, 1.0
  %v741 = vadd.f32 %v716, 1.0
  %v742 = vadd.f32 %v718, 1.0
  %v743 = vadd.f32 %v720, 1.0
  %v744 = vadd.f32 %v722, 1.0
  %v745 = vadd.f32 %v724, 1.0
  %v746 = vadd.f32 %v726, 1.0
  %v747 = vadd.f32 %v728, 1.0
  %v748 = vadd.f32 %v730, 1.0
  %v749 = vadd.f32 %v732, 1.0
  %v750 = vadd.f32 %v734, 1.0
  %v751 = vrcp.pop %v735
  %v752 = vmul.f32 1.0, %v751
  %v753 = vrcp.pop %v736
  %v754 = vmul.f32 1.0, %v753
  %v755 = vrcp.pop %v737
  %v756 = vmul.f32 1.0, %v755
  %v757 = vrcp.pop %v738
  %v758 = vmul.f32 1.0, %v757
  %v759 = vrcp.pop %v739
  %v760 = vmul.f32 1.0, %v759
  %v761 = vrcp.pop %v740
  %v762 = vmul.f32 1.0, %v761
  %v763 = vrcp.pop %v741
  %v764 = vmul.f32 1.0, %v763
  %v765 = vrcp.pop %v742
  %v766 = vmul.f32 1.0, %v765
  %v767 = vrcp.pop %v743
  %v768 = vmul.f32 1.0, %v767
  %v769 = vrcp.pop %v744
  %v770 = vmul.f32 1.0, %v769
  %v771 = vrcp.pop %v745
  %v772 = vmul.f32 1.0, %v771
  %v773 = vrcp.pop %v746
  %v774 = vmul.f32 1.0, %v773
  %v775 = vrcp.pop %v747
  %v776 = vmul.f32 1.0, %v775
  %v777 = vrcp.pop %v748
  %v778 = vmul.f32 1.0, %v777
  %v779 = vrcp.pop %v749
  %v780 = vmul.f32 1.0, %v779
  %v781 = vrcp.pop %v750
  %v782 = vmul.f32 1.0, %v781
  %v799 = vlaneseq
  %v800 = vand.u32 %v799, 127
  %v801 = vlaneseq
  %v802 = vshrl.u32 %v801, 7
  %v803 = vsub.s32 %v800, %v802
  %v804 = vrot.slane %v752, %v803
  %v805 = vadd.s32 %v800, 4294967288
  %v806 = vlaneseq
  %v807 = vshrl.u32 %v806, 7
  %v808 = vsub.s32 %v805, %v807
  %v809 = vrot.slane %v754, %v808
  %vm810 = vcmask 130112
  %v811 = vsel %vm810, %v809, %v804
  %v812 = vadd.s32 %v800, 4294967280
  %v813 = vlaneseq
  %v814 = vshrl.u32 %v813, 7
  %v815 = vsub.s32 %v812, %v814
  %v816 = vrot.slane %v756, %v815
  %vm817 = vcmask 195712
  %v818 = vsel %vm817, %v816, %v811
  %v819 = vadd.s32 %v800, 4294967272
  %v820 = vlaneseq
  %v821 = vshrl.u32 %v820, 7
  %v822 = vsub.s32 %v819, %v821
  %v823 = vrot.slane %v758, %v822
  %vm824 = vcmask 261312
  %v825 = vsel %vm824, %v823, %v818
  %v826 = vadd.s32 %v800, 4294967264
  %v827 = vlaneseq
  %v828 = vshrl.u32 %v827, 7
  %v829 = vsub.s32 %v826, %v828
  %v830 = vrot.slane %v760, %v829
  %vm831 = vcmask 326912
  %v832 = vsel %vm831, %v830, %v825
  %v833 = vadd.s32 %v800, 4294967256
  %v834 = vlaneseq
  %v835 = vshrl.u32 %v834, 7
  %v836 = vsub.s32 %v833, %v835
  %v837 = vrot.slane %v762, %v836
  %vm838 = vcmask 392512
  %v839 = vsel %vm838, %v837, %v832
  %v840 = vadd.s32 %v800, 4294967248
  %v841 = vlaneseq
  %v842 = vshrl.u32 %v841, 7
  %v843 = vsub.s32 %v840, %v842
  %v844 = vrot.slane %v764, %v843
  %vm845 = vcmask 458112
  %v846 = vsel %vm845, %v844, %v839
  %v847 = vadd.s32 %v800, 4294967240
  %v848 = vlaneseq
  %v849 = vshrl.u32 %v848, 7
  %v850 = vsub.s32 %v847, %v849
  %v851 = vrot.slane %v766, %v850
  %vm852 = vcmask 523712
  %v853 = vsel %vm852, %v851, %v846
  %v854 = vadd.s32 %v800, 4294967232
  %v855 = vlaneseq
  %v856 = vshrl.u32 %v855, 7
  %v857 = vsub.s32 %v854, %v856
  %v858 = vrot.slane %v768, %v857
  %vm859 = vcmask 589312
  %v860 = vsel %vm859, %v858, %v853
  %v861 = vadd.s32 %v800, 4294967224
  %v862 = vlaneseq
  %v863 = vshrl.u32 %v862, 7
  %v864 = vsub.s32 %v861, %v863
  %v865 = vrot.slane %v770, %v864
  %vm866 = vcmask 654912
  %v867 = vsel %vm866, %v865, %v860
  %v868 = vadd.s32 %v800, 4294967216
  %v869 = vlaneseq
  %v870 = vshrl.u32 %v869, 7
  %v871 = vsub.s32 %v868, %v870
  %v872 = vrot.slane %v772, %v871
  %vm873 = vcmask 720512
  %v874 = vsel %vm873, %v872, %v867
  %v875 = vadd.s32 %v800, 4294967208
  %v876 = vlaneseq
  %v877 = vshrl.u32 %v876, 7
  %v878 = vsub.s32 %v875, %v877
  %v879 = vrot.slane %v774, %v878
  %vm880 = vcmask 786112
  %v881 = vsel %vm880, %v879, %v874
  %v882 = vadd.s32 %v800, 4294967200
  %v883 = vlaneseq
  %v884 = vshrl.u32 %v883, 7
  %v885 = vsub.s32 %v882, %v884
  %v886 = vrot.slane %v776, %v885
  %vm887 = vcmask 851712
  %v888 = vsel %vm887, %v886, %v881
  %v889 = vadd.s32 %v800, 4294967192
  %v890 = vlaneseq
  %v891 = vshrl.u32 %v890, 7
  %v892 = vsub.s32 %v889, %v891
  %v893 = vrot.slane %v778, %v892
  %vm894 = vcmask 917312
  %v895 = vsel %vm894, %v893, %v888
  %v896 = vadd.s32 %v800, 4294967184
  %v897 = vlaneseq
  %v898 = vshrl.u32 %v897, 7
  %v899 = vsub.s32 %v896, %v898
  %v900 = vrot.slane %v780, %v899
  %vm901 = vcmask 982912
  %v902 = vsel %vm901, %v900, %v895
  %v903 = vadd.s32 %v800, 4294967176
  %v904 = vlaneseq
  %v905 = vshrl.u32 %v904, 7
  %v906 = vsub.s32 %v903, %v905
  %v907 = vrot.slane %v782, %v906
  %vm908 = vcmask 1048512
  %v909 = vsel %vm908, %v907, %v902
  %911 = vst [vmem:[%s7] sm:$0x1] %v909
  // Predicated region
  $region30: #{discriminator_forward.1} parent=0 // pred_check
    _
  $region31: #{discriminator_forward.1} parent=0 // pred_check_branch
    %913 = sbr.rel (0) target = $region33
  $region32: #{discriminator_forward.1} parent=0 // pred_region
    _
  $region33: #{discriminator_forward.1} parent=0 // pred_fallthru
    _
  // Predicated region
  $region34: #{discriminator_forward.1} parent=0 // pred_check
    _
  $region35: #{discriminator_forward.1} parent=0 // pred_check_branch
    %915 = sbr.rel (0) target = $region37
  $region36: #{discriminator_forward.1} parent=0 // pred_region
    _
  $region37: #{discriminator_forward.1} parent=0 // pred_fallthru
    _

</llo_original>
